<compile_context>
chip_gen: v6e
topology: v6e:2x2x1
jax: 0.10.0
libtpu: 0.0.40
codegen_flags: <defaults>
</compile_context>

<pallas_src>
import jax
import jax.numpy as jnp
from jax.experimental import pallas as pl
from jax.experimental.pallas import tpu as pltpu


def _make_dwconv_kernel(TN, W, C):
    """Kernel for one (batch, row-tile) grid step.

    Scratch strip layout (rows of C channels):
      [0:1]                zero        (only read under the w==0 mask)
      [1:1+W]              row above the tile (zeroed at the top border)
      [1+W:1+W+TN]         the TH*W tile tokens
      [1+W+TN:1+2W+TN]     row below the tile (zeroed at the bottom border)
      [1+2W+TN:2+2W+TN]    zero        (only read under the w==W-1 mask)
    Tap (i, j) of the 3x3 stencil (dh=i-1, dw=j-1) for all TN output tokens is
    then the TN-row slice of the strip starting at static offset i*W + j.
    """
    S0 = W + 1
    SROWS = TN + 2 * W + 2

    def kernel(xm_ref, pre_ref, post_ref, w_ref, b_ref, m_ref, o_ref, pad_ref):
        g = pl.program_id(1)
        pre_valid = jnp.where(g > 0, 1.0, 0.0).astype(jnp.float32)
        post_valid = jnp.where(g < pl.num_programs(1) - 1, 1.0, 0.0).astype(
            jnp.float32)

        # Assemble the zero-padded token strip (single cast to f32 here).
        zrow = jnp.zeros((1, C), jnp.float32)
        pad_ref[pl.ds(0, 1), :] = zrow
        pad_ref[pl.ds(SROWS - 1, 1), :] = zrow
        pad_ref[pl.ds(1, W), :] = pre_ref[0].astype(jnp.float32) * pre_valid
        pad_ref[pl.ds(S0, TN), :] = xm_ref[0].astype(jnp.float32)
        pad_ref[pl.ds(S0 + TN, W), :] = post_ref[0].astype(jnp.float32) * post_valid

        m = m_ref[...]                       # (TN, 2) f32 edge masks
        mask_l, mask_r = m[:, 0:1], m[:, 1:2]

        # Accumulator initialised with the bias (one broadcast per step).
        acc = jnp.broadcast_to(b_ref[...].astype(jnp.float32), (TN, C))

        parts = []
        for j in range(3):                   # dw = j - 1
            pj = None
            for i in range(3):               # dh = i - 1
                tap = pad_ref[pl.ds(i * W + j, TN), :]                   # (TN, C)
                wk = w_ref[pl.ds(i * 3 + j, 1), :].astype(jnp.float32)   # (1, C)
                term = tap * wk
                pj = term if pj is None else pj + term
            parts.append(pj)

        out = acc + parts[0] * mask_l + parts[1] + parts[2] * mask_r
        o_ref[0] = out.astype(o_ref.dtype)

    return kernel


def _pick_block_rows(H, W, C, itemsize, target_bytes=1 << 20):
    """Largest divisor TH of H whose (TH*W, C) tile stays under ~target_bytes."""
    if W % 8 != 0:
        return H
    best = 1
    for d in range(1, H + 1):
        if H % d == 0 and d * W * C * itemsize <= target_bytes:
            best = d
    return best


def dwconv(x, H, W, weight, bias, *, block_h=None):
    """Depthwise 3x3 conv (stride 1, pad 1, groups=C) over tokens.

    x: (B, N, C) with N == H*W (token n = h*W + w); weight: (C, 3, 3); bias: (C,).
    Equivalent to torch DWConv.forward (transpose -> Conv2d(groups=C) -> flatten).
    """
    B, N, C = x.shape
    assert N == H * W, "N must equal H*W"
    itemsize = jnp.dtype(x.dtype).itemsize

    TH = block_h if block_h is not None else _pick_block_rows(H, W, C, itemsize)
    if W % 8 != 0:
        TH = H                      # halo row-blocks need W % 8 == 0
    assert H % TH == 0, "block_h must divide H"
    GN = H // TH
    TN = TH * W

    # Tap weights (9, C): w9[i*3+j, c] = weight[c, i, j]; bias (1, C).
    w9 = jnp.transpose(weight.reshape(C, 9), (1, 0))
    b2 = bias.reshape(1, C)
    # Per-token W-edge masks (resident): col 0 gates dw=-1, col 1 gates dw=+1.
    wpos = jnp.arange(TN, dtype=jnp.int32) % W
    masks = jnp.stack([wpos > 0, wpos < W - 1], axis=1).astype(jnp.float32)

    if W % 8 == 0:
        # Halo rows read straight from x (no padded copy of x in HBM); index
        # maps clamp at the border, the kernel zeroes the invalid halos.
        pre_arr, post_arr = x, x
        pre_spec = pl.BlockSpec(
            (1, W, C), lambda b, g: (b, jnp.maximum(g * TH - 1, 0), 0))
        post_spec = pl.BlockSpec(
            (1, W, C), lambda b, g: (b, jnp.minimum(g * TH + TH, H - 1), 0))
    else:
        # Single tile per image: halos are true zero padding.
        zrow = jnp.zeros((B, W, C), x.dtype)
        pre_arr, post_arr = zrow, zrow
        pre_spec = pl.BlockSpec((1, W, C), lambda b, g: (b, 0, 0))
        post_spec = pl.BlockSpec((1, W, C), lambda b, g: (b, 0, 0))

    # VMEM budget: double-buffered streamed blocks + resident taps/masks + f32
    # strip + temporaries, with headroom; capped at 48 MiB so it stays safely
    # inside v7x's 64 MiB VMEM (v5e/v6e with 128 MiB could go larger).
    block_bytes = TN * C * itemsize
    est = (2 * (2 * block_bytes + 2 * W * C * itemsize)      # streamed, dbl-buffered
           + (TN + 2 * W + 2) * C * 4                        # f32 scratch strip
           + (10 * C + 2 * TN) * 4                           # taps + bias + masks
           + 8 * TN * C * 4)                                 # f32 temporaries
    vmem_limit = int(min(max(4 * est, 16 << 20), 48 << 20))

    cost = pl.CostEstimate(
        flops=2 * 9 * B * N * C + 4 * B * N * C,
        transcendentals=0,
        bytes_accessed=int(2 * B * N * C * itemsize
                           + B * GN * 2 * W * C * itemsize
                           + (10 * C + 2 * TN) * 4),
    )

    out = pl.pallas_call(
        _make_dwconv_kernel(TN, W, C),
        out_shape=jax.ShapeDtypeStruct((B, N, C), x.dtype),
        grid=(B, GN),
        in_specs=[
            pl.BlockSpec((1, TN, C), lambda b, g: (b, g, 0)),   # tile tokens
            pre_spec,                                           # row above (halo)
            post_spec,                                          # row below (halo)
            pl.BlockSpec((9, C), lambda b, g: (0, 0)),          # taps (resident)
            pl.BlockSpec((1, C), lambda b, g: (0, 0)),          # bias (resident)
            pl.BlockSpec((TN, 2), lambda b, g: (0, 0)),         # edge masks (resident)
        ],
        out_specs=pl.BlockSpec((1, TN, C), lambda b, g: (b, g, 0)),
        scratch_shapes=[pltpu.VMEM((TN + 2 * W + 2, C), jnp.float32)],
        compiler_params=pltpu.CompilerParams(
            dimension_semantics=("parallel", "parallel"),
            vmem_limit_bytes=vmem_limit,
        ),
        cost_estimate=cost,
    )(x, pre_arr, post_arr, w9, b2, masks)
    return out


def init_params(key, dim, dtype=jnp.float32):
    """Mirror torch.nn.Conv2d default init: U(-1/sqrt(fan_in), 1/sqrt(fan_in)),
    fan_in = (in_channels/groups) * kh * kw = 9 for a depthwise 3x3 conv."""
    kw, kb = jax.random.split(key)
    bound = 1.0 / (9 ** 0.5)
    weight = jax.random.uniform(kw, (dim, 3, 3), dtype, -bound, bound)
    bias = jax.random.uniform(kb, (dim,), dtype, -bound, bound)
    return weight, bias


if __name__ == "__main__":
    B, C, H, W = 2, 32, 16, 16
    N = H * W

    key = jax.random.PRNGKey(0)
    kx, kp = jax.random.split(key)
    x = jax.random.normal(kx, (B, N, C), jnp.float32)
    weight, bias = init_params(kp, C)

    # block_h=8 -> 2 row tiles per image: exercises the halo + mask path.
    out = dwconv(x, H, W, weight, bias, block_h=8)
    out = jax.block_until_ready(out)

    # Independent reference via XLA grouped conv (NCHW / OIHW, like torch).
    x_nchw = x.reshape(B, H, W, C).transpose(0, 3, 1, 2)
    ref_nchw = jax.lax.conv_general_dilated(
        x_nchw, weight.reshape(C, 1, 3, 3),
        window_strides=(1, 1), padding=((1, 1), (1, 1)),
        feature_group_count=C)
    ref = (ref_nchw + bias.reshape(1, C, 1, 1)).transpose(0, 2, 3, 1).reshape(B, N, C)

    assert out.shape == (B, N, C)
    assert jnp.allclose(out, ref, atol=1e-5, rtol=1e-5)

    print("KERNEL_OK")
</pallas_src>

<mosaic_0001>
module attributes {stable_mosaic.version = 11 : i64} {
  func.func @kernel(%arg0: i32, %arg1: i32, %arg2: memref<1x128x32xf32, #tpu.memory_space<vmem>>, %arg3: memref<1x16x32xf32, #tpu.memory_space<vmem>>, %arg4: memref<1x16x32xf32, #tpu.memory_space<vmem>>, %arg5: memref<9x32xf32, #tpu.memory_space<vmem>>, %arg6: memref<1x32xf32, #tpu.memory_space<vmem>>, %arg7: memref<128x2xf32, #tpu.memory_space<vmem>>, %arg8: memref<1x128x32xf32, #tpu.memory_space<vmem>>, %arg9: memref<162x32xf32, #tpu.memory_space<vmem>>) attributes {dimension_semantics = [#tpu.dimension_semantics<parallel>, #tpu.dimension_semantics<parallel>], iteration_bounds = array<i64: 2, 2>, scalar_prefetch = 0 : i64, scratch_operands = 1 : i64, tpu.core_type = #tpu.core_type<tc>, window_params = [{transform_indices = @transform_0, window_bounds = array<i64: 1, 128, 32>}, {transform_indices = @transform_1, window_bounds = array<i64: 1, 16, 32>}, {transform_indices = @transform_2, window_bounds = array<i64: 1, 16, 32>}, {pipeline_mode = #tpu.pipeline_mode<synchronous>, transform_indices = @transform_3, window_bounds = array<i64: 9, 32>}, {pipeline_mode = #tpu.pipeline_mode<synchronous>, transform_indices = @transform_4, window_bounds = array<i64: 1, 32>}, {pipeline_mode = #tpu.pipeline_mode<synchronous>, transform_indices = @transform_5, window_bounds = array<i64: 128, 2>}, {transform_indices = @transform_6, window_bounds = array<i64: 1, 128, 32>}]} {
    %c0_i32 = arith.constant 0 : i32
    %0 = arith.cmpi sgt, %arg1, %c0_i32 : i32
    %cst = arith.constant 1.000000e+00 : f32
    %cst_0 = arith.constant 0.000000e+00 : f32
    %1 = arith.select %0, %cst, %cst_0 : f32
    %c1_i32 = arith.constant 1 : i32
    %2 = arith.cmpi slt, %arg1, %c1_i32 : i32
    %cst_1 = arith.constant 1.000000e+00 : f32
    %cst_2 = arith.constant 0.000000e+00 : f32
    %3 = arith.select %2, %cst_1, %cst_2 : f32
    %cst_3 = arith.constant 0.000000e+00 : f32
    %4 = vector.broadcast %cst_3 : f32 to vector<1x32xf32>
    %c0 = arith.constant 0 : index
    %c0_4 = arith.constant 0 : index
    %5 = vector.load %arg9[%c0, %c0_4] : memref<162x32xf32, #tpu.memory_space<vmem>>, vector<1x32xf32>
    tpu.vector_store %arg9[%c0, %c0_4], %4 {strides = array<i32>} : memref<162x32xf32, #tpu.memory_space<vmem>>, vector<1x32xf32>,
    %c161 = arith.constant 161 : index
    %c0_5 = arith.constant 0 : index
    %6 = vector.load %arg9[%c161, %c0_5] : memref<162x32xf32, #tpu.memory_space<vmem>>, vector<1x32xf32>
    tpu.vector_store %arg9[%c161, %c0_5], %4 {strides = array<i32>} : memref<162x32xf32, #tpu.memory_space<vmem>>, vector<1x32xf32>,
    %c0_6 = arith.constant 0 : index
    %c0_7 = arith.constant 0 : index
    %c0_8 = arith.constant 0 : index
    %7 = vector.load %arg3[%c0_6, %c0_7, %c0_8] : memref<1x16x32xf32, #tpu.memory_space<vmem>>, vector<1x16x32xf32>
    %8 = vector.shape_cast %7 : vector<1x16x32xf32> to vector<16x32xf32>
    %9 = vector.broadcast %1 : f32 to vector<16x32xf32>
    %10 = arith.mulf %8, %9 : vector<16x32xf32>
    %c1 = arith.constant 1 : index
    %c0_9 = arith.constant 0 : index
    %11 = vector.load %arg9[%c1, %c0_9] : memref<162x32xf32, #tpu.memory_space<vmem>>, vector<16x32xf32>
    tpu.vector_store %arg9[%c1, %c0_9], %10 {strides = array<i32>} : memref<162x32xf32, #tpu.memory_space<vmem>>, vector<16x32xf32>,
    %c0_10 = arith.constant 0 : index
    %c0_11 = arith.constant 0 : index
    %c0_12 = arith.constant 0 : index
    %12 = vector.load %arg2[%c0_10, %c0_11, %c0_12] : memref<1x128x32xf32, #tpu.memory_space<vmem>>, vector<1x128x32xf32>
    %13 = vector.shape_cast %12 : vector<1x128x32xf32> to vector<128x32xf32>
    %c17 = arith.constant 17 : index
    %c0_13 = arith.constant 0 : index
    %14 = vector.load %arg9[%c17, %c0_13] : memref<162x32xf32, #tpu.memory_space<vmem>>, vector<128x32xf32>
    tpu.vector_store %arg9[%c17, %c0_13], %13 {strides = array<i32>} : memref<162x32xf32, #tpu.memory_space<vmem>>, vector<128x32xf32>,
    %c0_14 = arith.constant 0 : index
    %c0_15 = arith.constant 0 : index
    %c0_16 = arith.constant 0 : index
    %15 = vector.load %arg4[%c0_14, %c0_15, %c0_16] : memref<1x16x32xf32, #tpu.memory_space<vmem>>, vector<1x16x32xf32>
    %16 = vector.shape_cast %15 : vector<1x16x32xf32> to vector<16x32xf32>
    %17 = vector.broadcast %3 : f32 to vector<16x32xf32>
    %18 = arith.mulf %16, %17 : vector<16x32xf32>
    %c145 = arith.constant 145 : index
    %c0_17 = arith.constant 0 : index
    %19 = vector.load %arg9[%c145, %c0_17] : memref<162x32xf32, #tpu.memory_space<vmem>>, vector<16x32xf32>
    tpu.vector_store %arg9[%c145, %c0_17], %18 {strides = array<i32>} : memref<162x32xf32, #tpu.memory_space<vmem>>, vector<16x32xf32>,
    %c0_18 = arith.constant 0 : index
    %c0_19 = arith.constant 0 : index
    %20 = vector.load %arg7[%c0_18, %c0_19] : memref<128x2xf32, #tpu.memory_space<vmem>>, vector<128x2xf32>
    %21 = vector.extract_strided_slice %20 {offsets = [0, 0], sizes = [128, 1], strides = [1, 1]} : vector<128x2xf32> to vector<128x1xf32>
    %22 = vector.extract_strided_slice %20 {offsets = [0, 1], sizes = [128, 1], strides = [1, 1]} : vector<128x2xf32> to vector<128x1xf32>
    %c0_20 = arith.constant 0 : index
    %c0_21 = arith.constant 0 : index
    %23 = vector.load %arg6[%c0_20, %c0_21] : memref<1x32xf32, #tpu.memory_space<vmem>>, vector<1x32xf32>
    %24 = vector.shape_cast %23 : vector<1x32xf32> to vector<1x32xf32>
    %25 = vector.broadcast %24 : vector<1x32xf32> to vector<128x32xf32>
    %c0_22 = arith.constant 0 : index
    %c0_23 = arith.constant 0 : index
    %26 = vector.load %arg9[%c0_22, %c0_23] : memref<162x32xf32, #tpu.memory_space<vmem>>, vector<128x32xf32>
    %c0_24 = arith.constant 0 : index
    %c0_25 = arith.constant 0 : index
    %27 = vector.load %arg5[%c0_24, %c0_25] : memref<9x32xf32, #tpu.memory_space<vmem>>, vector<1x32xf32>
    %28 = vector.broadcast %27 : vector<1x32xf32> to vector<128x32xf32>
    %29 = arith.mulf %26, %28 : vector<128x32xf32>
    %c16 = arith.constant 16 : index
    %c0_26 = arith.constant 0 : index
    %30 = vector.load %arg9[%c16, %c0_26] : memref<162x32xf32, #tpu.memory_space<vmem>>, vector<128x32xf32>
    %c3 = arith.constant 3 : index
    %c0_27 = arith.constant 0 : index
    %31 = vector.load %arg5[%c3, %c0_27] : memref<9x32xf32, #tpu.memory_space<vmem>>, vector<1x32xf32>
    %32 = vector.broadcast %31 : vector<1x32xf32> to vector<128x32xf32>
    %33 = arith.mulf %30, %32 : vector<128x32xf32>
    %34 = arith.addf %29, %33 : vector<128x32xf32>
    %c32 = arith.constant 32 : index
    %c0_28 = arith.constant 0 : index
    %35 = vector.load %arg9[%c32, %c0_28] : memref<162x32xf32, #tpu.memory_space<vmem>>, vector<128x32xf32>
    %c6 = arith.constant 6 : index
    %c0_29 = arith.constant 0 : index
    %36 = vector.load %arg5[%c6, %c0_29] : memref<9x32xf32, #tpu.memory_space<vmem>>, vector<1x32xf32>
    %37 = vector.broadcast %36 : vector<1x32xf32> to vector<128x32xf32>
    %38 = arith.mulf %35, %37 : vector<128x32xf32>
    %39 = arith.addf %34, %38 : vector<128x32xf32>
    %c1_30 = arith.constant 1 : index
    %c0_31 = arith.constant 0 : index
    %40 = vector.load %arg9[%c1_30, %c0_31] : memref<162x32xf32, #tpu.memory_space<vmem>>, vector<128x32xf32>
    %c1_32 = arith.constant 1 : index
    %c0_33 = arith.constant 0 : index
    %41 = vector.load %arg5[%c1_32, %c0_33] : memref<9x32xf32, #tpu.memory_space<vmem>>, vector<1x32xf32>
    %42 = vector.broadcast %41 : vector<1x32xf32> to vector<128x32xf32>
    %43 = arith.mulf %40, %42 : vector<128x32xf32>
    %c17_34 = arith.constant 17 : index
    %c0_35 = arith.constant 0 : index
    %44 = vector.load %arg9[%c17_34, %c0_35] : memref<162x32xf32, #tpu.memory_space<vmem>>, vector<128x32xf32>
    %c4 = arith.constant 4 : index
    %c0_36 = arith.constant 0 : index
    %45 = vector.load %arg5[%c4, %c0_36] : memref<9x32xf32, #tpu.memory_space<vmem>>, vector<1x32xf32>
    %46 = vector.broadcast %45 : vector<1x32xf32> to vector<128x32xf32>
    %47 = arith.mulf %44, %46 : vector<128x32xf32>
    %48 = arith.addf %43, %47 : vector<128x32xf32>
    %c33 = arith.constant 33 : index
    %c0_37 = arith.constant 0 : index
    %49 = vector.load %arg9[%c33, %c0_37] : memref<162x32xf32, #tpu.memory_space<vmem>>, vector<128x32xf32>
    %c7 = arith.constant 7 : index
    %c0_38 = arith.constant 0 : index
    %50 = vector.load %arg5[%c7, %c0_38] : memref<9x32xf32, #tpu.memory_space<vmem>>, vector<1x32xf32>
    %51 = vector.broadcast %50 : vector<1x32xf32> to vector<128x32xf32>
    %52 = arith.mulf %49, %51 : vector<128x32xf32>
    %53 = arith.addf %48, %52 : vector<128x32xf32>
    %c2 = arith.constant 2 : index
    %c0_39 = arith.constant 0 : index
    %54 = vector.load %arg9[%c2, %c0_39] : memref<162x32xf32, #tpu.memory_space<vmem>>, vector<128x32xf32>
    %c2_40 = arith.constant 2 : index
    %c0_41 = arith.constant 0 : index
    %55 = vector.load %arg5[%c2_40, %c0_41] : memref<9x32xf32, #tpu.memory_space<vmem>>, vector<1x32xf32>
    %56 = vector.broadcast %55 : vector<1x32xf32> to vector<128x32xf32>
    %57 = arith.mulf %54, %56 : vector<128x32xf32>
    %c18 = arith.constant 18 : index
    %c0_42 = arith.constant 0 : index
    %58 = vector.load %arg9[%c18, %c0_42] : memref<162x32xf32, #tpu.memory_space<vmem>>, vector<128x32xf32>
    %c5 = arith.constant 5 : index
    %c0_43 = arith.constant 0 : index
    %59 = vector.load %arg5[%c5, %c0_43] : memref<9x32xf32, #tpu.memory_space<vmem>>, vector<1x32xf32>
    %60 = vector.broadcast %59 : vector<1x32xf32> to vector<128x32xf32>
    %61 = arith.mulf %58, %60 : vector<128x32xf32>
    %62 = arith.addf %57, %61 : vector<128x32xf32>
    %c34 = arith.constant 34 : index
    %c0_44 = arith.constant 0 : index
    %63 = vector.load %arg9[%c34, %c0_44] : memref<162x32xf32, #tpu.memory_space<vmem>>, vector<128x32xf32>
    %c8 = arith.constant 8 : index
    %c0_45 = arith.constant 0 : index
    %64 = vector.load %arg5[%c8, %c0_45] : memref<9x32xf32, #tpu.memory_space<vmem>>, vector<1x32xf32>
    %65 = vector.broadcast %64 : vector<1x32xf32> to vector<128x32xf32>
    %66 = arith.mulf %63, %65 : vector<128x32xf32>
    %67 = arith.addf %62, %66 : vector<128x32xf32>
    %68 = vector.broadcast %21 : vector<128x1xf32> to vector<128x32xf32>
    %69 = arith.mulf %39, %68 : vector<128x32xf32>
    %70 = arith.addf %25, %69 : vector<128x32xf32>
    %71 = arith.addf %70, %53 : vector<128x32xf32>
    %72 = vector.broadcast %22 : vector<128x1xf32> to vector<128x32xf32>
    %73 = arith.mulf %67, %72 : vector<128x32xf32>
    %74 = arith.addf %71, %73 : vector<128x32xf32>
    %c0_46 = arith.constant 0 : index
    %c0_47 = arith.constant 0 : index
    %c0_48 = arith.constant 0 : index
    %75 = vector.load %arg8[%c0_46, %c0_47, %c0_48] : memref<1x128x32xf32, #tpu.memory_space<vmem>>, vector<1x128x32xf32>
    %76 = vector.shape_cast %75 : vector<1x128x32xf32> to vector<128x32xf32>
    %77 = vector.shape_cast %74 : vector<128x32xf32> to vector<1x128x32xf32>
    tpu.vector_store %arg8[%c0_46, %c0_47, %c0_48], %77 {strides = array<i32>} : memref<1x128x32xf32, #tpu.memory_space<vmem>>, vector<1x128x32xf32>,
    return
  }
  func.func @transform_0(%arg0: i32, %arg1: i32) -> (i32, i32, i32) {
    %c0_i32 = arith.constant 0 : i32
    %c0_i32_0 = arith.constant 0 : i32
    return %arg0, %arg1, %c0_i32 : i32, i32, i32
  }
  func.func @transform_1(%arg0: i32, %arg1: i32) -> (i32, i32, i32) {
    %c8_i32 = arith.constant 8 : i32
    %0 = arith.muli %arg1, %c8_i32 : i32
    %c1_i32 = arith.constant 1 : i32
    %1 = arith.subi %0, %c1_i32 : i32
    %c0_i32 = arith.constant 0 : i32
    %2 = arith.maxsi %1, %c0_i32 : i32
    %c0_i32_0 = arith.constant 0 : i32
    %c0_i32_1 = arith.constant 0 : i32
    return %arg0, %2, %c0_i32_0 : i32, i32, i32
  }
  func.func @transform_2(%arg0: i32, %arg1: i32) -> (i32, i32, i32) {
    %c8_i32 = arith.constant 8 : i32
    %0 = arith.muli %arg1, %c8_i32 : i32
    %c8_i32_0 = arith.constant 8 : i32
    %1 = arith.addi %0, %c8_i32_0 : i32
    %c15_i32 = arith.constant 15 : i32
    %2 = arith.minsi %1, %c15_i32 : i32
    %c0_i32 = arith.constant 0 : i32
    %c0_i32_1 = arith.constant 0 : i32
    return %arg0, %2, %c0_i32 : i32, i32, i32
  }
  func.func @transform_3(%arg0: i32, %arg1: i32) -> (i32, i32) {
    %c0_i32 = arith.constant 0 : i32
    %c0_i32_0 = arith.constant 0 : i32
    %c0_i32_1 = arith.constant 0 : i32
    return %c0_i32, %c0_i32_0 : i32, i32
  }
  func.func @transform_4(%arg0: i32, %arg1: i32) -> (i32, i32) {
    %c0_i32 = arith.constant 0 : i32
    %c0_i32_0 = arith.constant 0 : i32
    %c0_i32_1 = arith.constant 0 : i32
    return %c0_i32, %c0_i32_0 : i32, i32
  }
  func.func @transform_5(%arg0: i32, %arg1: i32) -> (i32, i32) {
    %c0_i32 = arith.constant 0 : i32
    %c0_i32_0 = arith.constant 0 : i32
    %c0_i32_1 = arith.constant 0 : i32
    return %c0_i32, %c0_i32_0 : i32, i32
  }
  func.func @transform_6(%arg0: i32, %arg1: i32) -> (i32, i32, i32) {
    %c0_i32 = arith.constant 0 : i32
    %c0_i32_0 = arith.constant 0 : i32
    return %arg0, %arg1, %c0_i32 : i32, i32, i32
  }
}

</mosaic_0001>

<llo_original>
// kernel: tpu_custom_call.1
$region0: #{tpu_custom_call.1}
  #allocation0 [shape = 'u32[]', space=smem, size = 0x4, offset = 0x4, fixed_abs, tag = 'smem constant byte address 0x4 - core index']
  #allocation1 [shape = 'u32[144,128]{1,0:T(1,128)}', space=vmem, size = 0x12000, scoped, tag = 'internal scratch']
  #allocation2 [shape = 'f32[162,32]{1,0:T(8,128)}', space=vmem, size = 0x15000, scoped, tag = 'scratch operand']
  %s0 = inlined_call_operand.vmem [shape: f32[2,256,32], index: 0, kind: input, shape index: {}]
  %s1 = inlined_call_operand.vmem [shape: f32[2,256,32], index: 1, kind: input, shape index: {}]
  %s2 = inlined_call_operand.vmem [shape: f32[2,256,32], index: 2, kind: input, shape index: {}]
  %s3 = inlined_call_operand.vmem [shape: f32[9,32], index: 3, kind: input, shape index: {}]
  %s4 = inlined_call_operand.vmem [shape: f32[1,32], index: 4, kind: input, shape index: {}]
  %s5 = inlined_call_operand.vmem [shape: f32[128,2], index: 5, kind: input, shape index: {}]
  %s6 = inlined_call_operand.vmem [shape: f32[2,256,32], index: 6, kind: output, shape index: {}]
  %s7 = sld [smem:[#allocation0]]
  $region57: #{tpu_custom_call.1} parent=0
    _
  %s9 = ssub.s32 1, %s7
  %s10 = scalar_select 0, %s9, %s7
  loop: start=0, step=1, limit=6
  $region2: #{tpu_custom_call.1} parent=0 // loop_pre_header
    _
  $region3: #{tpu_custom_call.1} parent=0 // loop_header
    %s12 = sphi 0, %s16
    %p13 = scmp.ge.s32.totalorder %s12, 6
    %s19 = sphi 0, %s31
    %s20 = sphi 0, %s27
    %s21 = sphi 0, %s19
    %s22 = sphi 0, %s20
    %s23 = sphi 0, %s21
    %s24 = sphi 0, %s22
    %s36 = sphi 0, %s38
    %s39 = sphi 0, %s36
    %s40 = sphi 0, %s39
    %s56 = sphi 0, %s40
    %s72 = sphi 0, %s74
    %s75 = sphi 0, %s72
    %s76 = sphi 0, %s75
    %s92 = sphi 0, %s76
    %s108 = sphi 0, %s110
    %s111 = sphi 0, %s108
    %s112 = sphi 0, %s111
    %s128 = sphi 0, %s112
    %s132 = sphi 0, %s132
    %s134 = sphi 0, %s132
    %s135 = sphi 0, %s134
    %s149 = sphi 0, %s135
    %s153 = sphi 0, %s153
    %s155 = sphi 0, %s153
    %s156 = sphi 0, %s155
    %s170 = sphi 0, %s156
    %s174 = sphi 0, %s174
    %s176 = sphi 0, %s174
    %s177 = sphi 0, %s176
    %s191 = sphi 0, %s177
    %s199 = sphi 0, %s201
    %s202 = sphi 0, %s199
    %s203 = sphi 0, %s202
    %s219 = sphi 0, %s203
  $region4: #{tpu_custom_call.1} parent=0 // loop_header_branch
    %15 = sbr.rel (%p13) target = $region8
  $region5: #{tpu_custom_call.1} parent=0 // loop_body
    %s17 = ssub.s32 %s12, 1
    %s18 = ssub.s32 %s12, 2
    %s25 = sadd.s32 1, %s20
    %p26 = scmp.ge.s32.totalorder %s25, 2
    %s27 = scalar_select %p26, 0, %s25
    %s28 = sadd.s32 1, %s19
    %s29 = scalar_select %p26, %s28, %s19
    %p30 = scmp.ge.s32.totalorder %s29, 2
    %s31 = scalar_select %p30, 0, %s29
    %s32 = ssub.s32 %s19, %s31
    %s33 = ssub.s32 %s20, %s27
    %s34 = sor.u32 %s32, %s33
    %p35 = scmp.eq.s32.totalorder %s34, 0
    %s37 = sadd.s32 %s36, 1
    %s38 = scalar_select %p35, %s36, %s37
    %p41 = pneg %p35
    %p42 = scmp.eq.s32.totalorder %s12, 3
    %p43 = por %p41, %p42
    %p44 = scmp.ne.s32.totalorder %s36, %s39
    %p45 = scmp.eq.s32.totalorder %s12, 0
    %p46 = por %p44, %p45
    %p47 = scmp.ne.s32.totalorder %s36, %s39
    %p48 = scmp.eq.s32.totalorder %s17, 3
    %p49 = por %p47, %p48
    %p50 = scmp.ne.s32.totalorder %s39, %s40
    %p51 = scmp.eq.s32.totalorder %s17, 0
    %p52 = por %p50, %p51
    %p53 = scmp.ne.s32.totalorder %s39, %s40
    %p54 = scmp.eq.s32.totalorder %s18, 3
    %p55 = por %p53, %p54
    %p57 = scmp.ne.s32.totalorder %s40, %s56
    %p58 = scmp.eq.s32.totalorder %s18, 0
    %p59 = por %p57, %p58
    %s60 = smul.u32 %s20, 8
    %s61 = ssub.s32 %s60, 1
    %p62 = scmp.gt.s32.totalorder %s61, 0
    %s63 = scalar_select %p62, %s61, 0
    %s64 = smul.u32 %s27, 8
    %s65 = ssub.s32 %s64, 1
    %p66 = scmp.gt.s32.totalorder %s65, 0
    %s67 = scalar_select %p66, %s65, 0
    %s68 = ssub.s32 %s19, %s31
    %s69 = ssub.s32 %s63, %s67
    %s70 = sor.u32 %s68, %s69
    %p71 = scmp.eq.s32.totalorder %s70, 0
    %s73 = sadd.s32 %s72, 1
    %s74 = scalar_select %p71, %s72, %s73
    %p77 = pneg %p71
    %p78 = scmp.eq.s32.totalorder %s12, 3
    %p79 = por %p77, %p78
    %p80 = scmp.ne.s32.totalorder %s72, %s75
    %p81 = scmp.eq.s32.totalorder %s12, 0
    %p82 = por %p80, %p81
    %p83 = scmp.ne.s32.totalorder %s72, %s75
    %p84 = scmp.eq.s32.totalorder %s17, 3
    %p85 = por %p83, %p84
    %p86 = scmp.ne.s32.totalorder %s75, %s76
    %p87 = scmp.eq.s32.totalorder %s17, 0
    %p88 = por %p86, %p87
    %p89 = scmp.ne.s32.totalorder %s75, %s76
    %p90 = scmp.eq.s32.totalorder %s18, 3
    %p91 = por %p89, %p90
    %p93 = scmp.ne.s32.totalorder %s76, %s92
    %p94 = scmp.eq.s32.totalorder %s18, 0
    %p95 = por %p93, %p94
    %s96 = smul.u32 %s20, 8
    %s97 = sadd.s32 %s96, 8
    %p98 = scmp.lt.s32.totalorder %s97, 15
    %s99 = scalar_select %p98, %s97, 15
    %s100 = smul.u32 %s27, 8
    %s101 = sadd.s32 %s100, 8
    %p102 = scmp.lt.s32.totalorder %s101, 15
    %s103 = scalar_select %p102, %s101, 15
    %s104 = ssub.s32 %s19, %s31
    %s105 = ssub.s32 %s99, %s103
    %s106 = sor.u32 %s104, %s105
    %p107 = scmp.eq.s32.totalorder %s106, 0
    %s109 = sadd.s32 %s108, 1
    %s110 = scalar_select %p107, %s108, %s109
    %p113 = pneg %p107
    %p114 = scmp.eq.s32.totalorder %s12, 3
    %p115 = por %p113, %p114
    %p116 = scmp.ne.s32.totalorder %s108, %s111
    %p117 = scmp.eq.s32.totalorder %s12, 0
    %p118 = por %p116, %p117
    %p119 = scmp.ne.s32.totalorder %s108, %s111
    %p120 = scmp.eq.s32.totalorder %s17, 3
    %p121 = por %p119, %p120
    %p122 = scmp.ne.s32.totalorder %s111, %s112
    %p123 = scmp.eq.s32.totalorder %s17, 0
    %p124 = por %p122, %p123
    %p125 = scmp.ne.s32.totalorder %s111, %s112
    %p126 = scmp.eq.s32.totalorder %s18, 3
    %p127 = por %p125, %p126
    %p129 = scmp.ne.s32.totalorder %s112, %s128
    %p130 = scmp.eq.s32.totalorder %s18, 0
    %p131 = por %p129, %p130
    %s133 = sadd.s32 %s132, 1
    %p136 = scmp.eq.s32.totalorder %s12, 3
    %p137 = scmp.ne.s32.totalorder %s132, %s134
    %p138 = scmp.eq.s32.totalorder %s12, 0
    %p139 = por %p137, %p138
    %p140 = scmp.ne.s32.totalorder %s132, %s134
    %p141 = scmp.eq.s32.totalorder %s17, 3
    %p142 = por %p140, %p141
    %p143 = scmp.ne.s32.totalorder %s134, %s135
    %p144 = scmp.eq.s32.totalorder %s17, 0
    %p145 = por %p143, %p144
    %p146 = scmp.ne.s32.totalorder %s134, %s135
    %p147 = scmp.eq.s32.totalorder %s18, 3
    %p148 = por %p146, %p147
    %p150 = scmp.ne.s32.totalorder %s135, %s149
    %p151 = scmp.eq.s32.totalorder %s18, 0
    %p152 = por %p150, %p151
    %s154 = sadd.s32 %s153, 1
    %p157 = scmp.eq.s32.totalorder %s12, 3
    %p158 = scmp.ne.s32.totalorder %s153, %s155
    %p159 = scmp.eq.s32.totalorder %s12, 0
    %p160 = por %p158, %p159
    %p161 = scmp.ne.s32.totalorder %s153, %s155
    %p162 = scmp.eq.s32.totalorder %s17, 3
    %p163 = por %p161, %p162
    %p164 = scmp.ne.s32.totalorder %s155, %s156
    %p165 = scmp.eq.s32.totalorder %s17, 0
    %p166 = por %p164, %p165
    %p167 = scmp.ne.s32.totalorder %s155, %s156
    %p168 = scmp.eq.s32.totalorder %s18, 3
    %p169 = por %p167, %p168
    %p171 = scmp.ne.s32.totalorder %s156, %s170
    %p172 = scmp.eq.s32.totalorder %s18, 0
    %p173 = por %p171, %p172
    %s175 = sadd.s32 %s174, 1
    %p178 = scmp.eq.s32.totalorder %s12, 3
    %p179 = scmp.ne.s32.totalorder %s174, %s176
    %p180 = scmp.eq.s32.totalorder %s12, 0
    %p181 = por %p179, %p180
    %p182 = scmp.ne.s32.totalorder %s174, %s176
    %p183 = scmp.eq.s32.totalorder %s17, 3
    %p184 = por %p182, %p183
    %p185 = scmp.ne.s32.totalorder %s176, %s177
    %p186 = scmp.eq.s32.totalorder %s17, 0
    %p187 = por %p185, %p186
    %p188 = scmp.ne.s32.totalorder %s176, %s177
    %p189 = scmp.eq.s32.totalorder %s18, 3
    %p190 = por %p188, %p189
    %p192 = scmp.ne.s32.totalorder %s177, %s191
    %p193 = scmp.eq.s32.totalorder %s18, 0
    %p194 = por %p192, %p193
    %s195 = ssub.s32 %s19, %s31
    %s196 = ssub.s32 %s20, %s27
    %s197 = sor.u32 %s195, %s196
    %p198 = scmp.eq.s32.totalorder %s197, 0
    %s200 = sadd.s32 %s199, 1
    %s201 = scalar_select %p198, %s199, %s200
    %p204 = pneg %p198
    %p205 = scmp.eq.s32.totalorder %s12, 3
    %p206 = por %p204, %p205
    %p207 = scmp.ne.s32.totalorder %s199, %s202
    %p208 = scmp.eq.s32.totalorder %s12, 0
    %p209 = por %p207, %p208
    %p210 = scmp.ne.s32.totalorder %s199, %s202
    %p211 = scmp.eq.s32.totalorder %s17, 3
    %p212 = por %p210, %p211
    %p213 = scmp.ne.s32.totalorder %s202, %s203
    %p214 = scmp.eq.s32.totalorder %s17, 0
    %p215 = por %p213, %p214
    %p216 = scmp.ne.s32.totalorder %s202, %s203
    %p217 = scmp.eq.s32.totalorder %s18, 3
    %p218 = por %p216, %p217
    %p220 = scmp.ne.s32.totalorder %s203, %s219
    %p221 = scmp.eq.s32.totalorder %s18, 0
    %p222 = por %p220, %p221
    %p223 = scmp.le.s32.totalorder 1, %s12
    %p224 = scmp.lt.s32.totalorder %s12, 5
    %p225 = pnand %p223, %p224
    %p226 = pneg %p225
    // Predicated region
    $region9: #{tpu_custom_call.1} parent=5 // pred_check
      _
    $region10: #{tpu_custom_call.1} parent=5 // pred_check_branch
      %228 = sbr.rel (%p225) target = $region12
    $region11: #{tpu_custom_call.1} parent=5 // pred_region
      %s229 = ssub.s32 %s12, 1
      // Predicated region
      $region13: #{tpu_custom_call.1} parent=11 // pred_check
        %p230 = pneg %p145
      $region14: #{tpu_custom_call.1} parent=11 // pred_check_branch
        %232 = sbr.rel (%p230) target = $region16
      $region15: #{tpu_custom_call.1} parent=11 // pred_region
        _
      $region16: #{tpu_custom_call.1} parent=11 // pred_fallthru
        _
      // Predicated region
      $region17: #{tpu_custom_call.1} parent=11 // pred_check
        %p233 = pneg %p166
      $region18: #{tpu_custom_call.1} parent=11 // pred_check_branch
        %235 = sbr.rel (%p233) target = $region20
      $region19: #{tpu_custom_call.1} parent=11 // pred_region
        _
      $region20: #{tpu_custom_call.1} parent=11 // pred_fallthru
        _
      // Predicated region
      $region21: #{tpu_custom_call.1} parent=11 // pred_check
        %p236 = pneg %p187
      $region22: #{tpu_custom_call.1} parent=11 // pred_check_branch
        %238 = sbr.rel (%p236) target = $region24
      $region23: #{tpu_custom_call.1} parent=11 // pred_region
        _
      $region24: #{tpu_custom_call.1} parent=11 // pred_fallthru
        _
    $region12: #{tpu_custom_call.1} parent=5 // pred_fallthru
      _
    %p239 = scmp.lt.s32.totalorder %s12, 4
    // Predicated region
    $region25: #{tpu_custom_call.1} parent=5 // pred_check
      %p240 = pneg %p239
    $region26: #{tpu_custom_call.1} parent=5 // pred_check_branch
      %242 = sbr.rel (%p240) target = $region28
    $region27: #{tpu_custom_call.1} parent=5 // pred_region
      // Predicated region
      $region29: #{tpu_custom_call.1} parent=27 // pred_check
        %p243 = pneg %p46
      $region30: #{tpu_custom_call.1} parent=27 // pred_check_branch
        %245 = sbr.rel (%p243) target = $region32
      $region31: #{tpu_custom_call.1} parent=27 // pred_region
        %s246 = smul.u32 16, %s20
        %p247 = scmp.lt.s32.totalorder %s19, 1
        %s248 = scalar_select %p247, %s19, 1
        %p249 = scmp.lt.s32.totalorder %s246, 31
        %s250 = scalar_select %p249, %s246, 31
        %s251 = smul.addr %s248, 32
        %s252 = sadd.s32 %s250, %s251
        %s253 = smul.addr %s252, 8
        %s254 = scalar_lea.vmem %s0, %s253
        %s255 = smul.u32 16, %s20
      $region32: #{tpu_custom_call.1} parent=27 // pred_fallthru
        _
      // Predicated region
      $region33: #{tpu_custom_call.1} parent=27 // pred_check
        %p256 = pneg %p82
      $region34: #{tpu_custom_call.1} parent=27 // pred_check_branch
        %258 = sbr.rel (%p256) target = $region36
      $region35: #{tpu_custom_call.1} parent=27 // pred_region
        %s259 = smul.u32 %s20, 8
        %s260 = ssub.s32 %s259, 1
        %p261 = scmp.gt.s32.totalorder %s260, 0
        %s262 = scalar_select %p261, %s260, 0
        %s263 = smul.u32 2, %s262
        %p264 = scmp.lt.s32.totalorder %s19, 1
        %s265 = scalar_select %p264, %s19, 1
        %p266 = scmp.lt.s32.totalorder %s263, 31
        %s267 = scalar_select %p266, %s263, 31
        %s268 = smul.addr %s265, 32
        %s269 = sadd.s32 %s267, %s268
        %s270 = smul.addr %s269, 8
        %s271 = scalar_lea.vmem %s1, %s270
        %s272 = smul.u32 %s20, 8
        %s273 = ssub.s32 %s272, 1
        %p274 = scmp.gt.s32.totalorder %s273, 0
        %s275 = scalar_select %p274, %s273, 0
        %s276 = smul.u32 2, %s275
      $region36: #{tpu_custom_call.1} parent=27 // pred_fallthru
        _
      // Predicated region
      $region37: #{tpu_custom_call.1} parent=27 // pred_check
        %p277 = pneg %p118
      $region38: #{tpu_custom_call.1} parent=27 // pred_check_branch
        %279 = sbr.rel (%p277) target = $region40
      $region39: #{tpu_custom_call.1} parent=27 // pred_region
        %s280 = smul.u32 %s20, 8
        %s281 = sadd.s32 %s280, 8
        %p282 = scmp.lt.s32.totalorder %s281, 15
        %s283 = scalar_select %p282, %s281, 15
        %s284 = smul.u32 2, %s283
        %p285 = scmp.lt.s32.totalorder %s19, 1
        %s286 = scalar_select %p285, %s19, 1
        %p287 = scmp.lt.s32.totalorder %s284, 31
        %s288 = scalar_select %p287, %s284, 31
        %s289 = smul.addr %s286, 32
        %s290 = sadd.s32 %s288, %s289
        %s291 = smul.addr %s290, 8
        %s292 = scalar_lea.vmem %s2, %s291
        %s293 = smul.u32 %s20, 8
        %s294 = sadd.s32 %s293, 8
        %p295 = scmp.lt.s32.totalorder %s294, 15
        %s296 = scalar_select %p295, %s294, 15
        %s297 = smul.u32 2, %s296
      $region40: #{tpu_custom_call.1} parent=27 // pred_fallthru
        _
    $region28: #{tpu_custom_call.1} parent=5 // pred_fallthru
      _
    %p298 = scmp.le.s32.totalorder 1, %s12
    %p299 = scmp.lt.s32.totalorder %s12, 5
    %p300 = pnand %p298, %p299
    %p301 = pneg %p300
    // Predicated region
    $region41: #{tpu_custom_call.1} parent=5 // pred_check
      _
    $region42: #{tpu_custom_call.1} parent=5 // pred_check_branch
      %303 = sbr.rel (%p300) target = $region44
    $region43: #{tpu_custom_call.1} parent=5 // pred_region
      %s304 = ssub.s32 %s12, 1
      %s305 = smul.u32 16, %s22
      %p306 = scmp.lt.s32.totalorder %s21, 1
      %s307 = scalar_select %p306, %s21, 1
      %p308 = scmp.lt.s32.totalorder %s305, 31
      %s309 = scalar_select %p308, %s305, 31
      %s310 = smul.addr %s307, 32
      %s311 = sadd.s32 %s309, %s310
      %s312 = smul.addr %s311, 8
      %s313 = scalar_lea.vmem %s0, %s312
      %p314 = pneg %p52
      %p315 = pneg %p49
      %s316 = smul.u32 %s22, 8
      %s317 = ssub.s32 %s316, 1
      %p318 = scmp.gt.s32.totalorder %s317, 0
      %s319 = scalar_select %p318, %s317, 0
      %s320 = smul.u32 2, %s319
      %p321 = scmp.lt.s32.totalorder %s21, 1
      %s322 = scalar_select %p321, %s21, 1
      %p323 = scmp.lt.s32.totalorder %s320, 31
      %s324 = scalar_select %p323, %s320, 31
      %s325 = smul.addr %s322, 32
      %s326 = sadd.s32 %s324, %s325
      %s327 = smul.addr %s326, 8
      %s328 = scalar_lea.vmem %s1, %s327
      %p329 = pneg %p88
      %p330 = pneg %p85
      %s331 = smul.u32 %s22, 8
      %s332 = sadd.s32 %s331, 8
      %p333 = scmp.lt.s32.totalorder %s332, 15
      %s334 = scalar_select %p333, %s332, 15
      %s335 = smul.u32 2, %s334
      %p336 = scmp.lt.s32.totalorder %s21, 1
      %s337 = scalar_select %p336, %s21, 1
      %p338 = scmp.lt.s32.totalorder %s335, 31
      %s339 = scalar_select %p338, %s335, 31
      %s340 = smul.addr %s337, 32
      %s341 = sadd.s32 %s339, %s340
      %s342 = smul.addr %s341, 8
      %s343 = scalar_lea.vmem %s2, %s342
      %p344 = pneg %p124
      %p345 = pneg %p121
      %p346 = pneg %p145
      %p347 = pneg %p142
      %p348 = pneg %p166
      %p349 = pneg %p163
      %p350 = pneg %p187
      %p351 = pneg %p184
      %p352 = pneg %p215
      %p353 = pneg %p212
      %s354 = smul.u32 16, %s22
      %p355 = scmp.lt.s32.totalorder %s21, 1
      %s356 = scalar_select %p355, %s21, 1
      %p357 = scmp.lt.s32.totalorder %s354, 31
      %s358 = scalar_select %p357, %s354, 31
      %s359 = smul.addr %s356, 32
      %s360 = sadd.s32 %s358, %s359
      %s361 = smul.addr %s360, 8
      %s362 = scalar_lea.vmem %s6, %s361
      %s363 = smul.u32 16, %s22
      %p364 = scmp.lt.s32.totalorder %s21, 1
      %s365 = scalar_select %p364, %s21, 1
      %p366 = scmp.lt.s32.totalorder %s363, 31
      %s367 = scalar_select %p366, %s363, 31
      %s368 = smul.addr %s365, 32
      %s369 = sadd.s32 %s367, %s368
      %s370 = smul.addr %s369, 8
      %s371 = scalar_lea.vmem %s0, %s370
      %s372 = smul.u32 16, %s22
      %s373 = smul.u32 %s22, 8
      %s374 = ssub.s32 %s373, 1
      %p375 = scmp.gt.s32.totalorder %s374, 0
      %s376 = scalar_select %p375, %s374, 0
      %s377 = smul.u32 2, %s376
      %p378 = scmp.lt.s32.totalorder %s21, 1
      %s379 = scalar_select %p378, %s21, 1
      %p380 = scmp.lt.s32.totalorder %s377, 31
      %s381 = scalar_select %p380, %s377, 31
      %s382 = smul.addr %s379, 32
      %s383 = sadd.s32 %s381, %s382
      %s384 = smul.addr %s383, 8
      %s385 = scalar_lea.vmem %s1, %s384
      %s386 = smul.u32 %s22, 8
      %s387 = ssub.s32 %s386, 1
      %p388 = scmp.gt.s32.totalorder %s387, 0
      %s389 = scalar_select %p388, %s387, 0
      %s390 = smul.u32 2, %s389
      %s391 = smul.u32 %s22, 8
      %s392 = sadd.s32 %s391, 8
      %p393 = scmp.lt.s32.totalorder %s392, 15
      %s394 = scalar_select %p393, %s392, 15
      %s395 = smul.u32 2, %s394
      %p396 = scmp.lt.s32.totalorder %s21, 1
      %s397 = scalar_select %p396, %s21, 1
      %p398 = scmp.lt.s32.totalorder %s395, 31
      %s399 = scalar_select %p398, %s395, 31
      %s400 = smul.addr %s397, 32
      %s401 = sadd.s32 %s399, %s400
      %s402 = smul.addr %s401, 8
      %s403 = scalar_lea.vmem %s2, %s402
      %s404 = smul.u32 %s22, 8
      %s405 = sadd.s32 %s404, 8
      %p406 = scmp.lt.s32.totalorder %s405, 15
      %s407 = scalar_select %p406, %s405, 15
      %s408 = smul.u32 2, %s407
      %s409 = smul.u32 16, %s22
      %p410 = scmp.lt.s32.totalorder %s21, 1
      %s411 = scalar_select %p410, %s21, 1
      %p412 = scmp.lt.s32.totalorder %s409, 31
      %s413 = scalar_select %p412, %s409, 31
      %s414 = smul.addr %s411, 32
      %s415 = sadd.s32 %s413, %s414
      %s416 = smul.addr %s415, 8
      %s417 = scalar_lea.vmem %s6, %s416
      %s418 = smul.u32 16, %s22
      %p419 = scmp.gt.s32.totalorder %s22, 0
      %s420 = scalar_select %p419, 1.0, 0.0
      %p421 = scmp.lt.s32.totalorder %s22, 1
      %s422 = scalar_select %p421, 1.0, 0.0
      %vm423 = vcmask 253952
      %424 = vst.msk [vmem:[#allocation2] sm:$0x1] %vm423, 0.0
      %425 = vst.msk [vmem:[#allocation2 + $0xa1] sm:$0x1] %vm423, 0.0
      %v426 = vld [vmem:[%s385] sm:$0xff]
      %v427 = vld [vmem:[%s385 + $0x8] sm:$0xff]
      %v428 = vstv %s420
      %v429 = vmul.f32 %v426, %v428
      %v430 = vmul.f32 %v427, %v428
      %vm431 = vcmask 261120
      %432 = vst.msk [vmem:[#allocation2 + $0x1] sm:$0xff] %vm431, %v429
      %433 = vst.msk [vmem:[#allocation2 + $0x9] sm:$0xff] %vm431, %v430
      %v434 = vld [vmem:[%s371] sm:$0xff]
      %v435 = vld [vmem:[%s371 + $0x8] sm:$0xff]
      %v436 = vld [vmem:[%s371 + $0x10] sm:$0xff]
      %v437 = vld [vmem:[%s371 + $0x18] sm:$0xff]
      %v438 = vld [vmem:[%s371 + $0x20] sm:$0xff]
      %v439 = vld [vmem:[%s371 + $0x28] sm:$0xff]
      %v440 = vld [vmem:[%s371 + $0x30] sm:$0xff]
      %v441 = vld [vmem:[%s371 + $0x38] sm:$0xff]
      %v442 = vld [vmem:[%s371 + $0x40] sm:$0xff]
      %v443 = vld [vmem:[%s371 + $0x48] sm:$0xff]
      %v444 = vld [vmem:[%s371 + $0x50] sm:$0xff]
      %v445 = vld [vmem:[%s371 + $0x58] sm:$0xff]
      %v446 = vld [vmem:[%s371 + $0x60] sm:$0xff]
      %v447 = vld [vmem:[%s371 + $0x68] sm:$0xff]
      %v448 = vld [vmem:[%s371 + $0x70] sm:$0xff]
      %v449 = vld [vmem:[%s371 + $0x78] sm:$0xff]
      %450 = vst.msk [vmem:[#allocation2 + $0x11] sm:$0xff] %vm431, %v434
      %451 = vst.msk [vmem:[#allocation2 + $0x19] sm:$0xff] %vm431, %v435
      %452 = vst.msk [vmem:[#allocation2 + $0x21] sm:$0xff] %vm431, %v436
      %453 = vst.msk [vmem:[#allocation2 + $0x29] sm:$0xff] %vm431, %v437
      %454 = vst.msk [vmem:[#allocation2 + $0x31] sm:$0xff] %vm431, %v438
      %455 = vst.msk [vmem:[#allocation2 + $0x39] sm:$0xff] %vm431, %v439
      %456 = vst.msk [vmem:[#allocation2 + $0x41] sm:$0xff] %vm431, %v440
      %457 = vst.msk [vmem:[#allocation2 + $0x49] sm:$0xff] %vm431, %v441
      %458 = vst.msk [vmem:[#allocation2 + $0x51] sm:$0xff] %vm431, %v442
      %459 = vst.msk [vmem:[#allocation2 + $0x59] sm:$0xff] %vm431, %v443
      %460 = vst.msk [vmem:[#allocation2 + $0x61] sm:$0xff] %vm431, %v444
      %461 = vst.msk [vmem:[#allocation2 + $0x69] sm:$0xff] %vm431, %v445
      %462 = vst.msk [vmem:[#allocation2 + $0x71] sm:$0xff] %vm431, %v446
      %463 = vst.msk [vmem:[#allocation2 + $0x79] sm:$0xff] %vm431, %v447
      %464 = vst.msk [vmem:[#allocation2 + $0x81] sm:$0xff] %vm431, %v448
      %465 = vst.msk [vmem:[#allocation2 + $0x89] sm:$0xff] %vm431, %v449
      %v466 = vld [vmem:[%s403] sm:$0xff]
      %v467 = vld [vmem:[%s403 + $0x8] sm:$0xff]
      %v468 = vstv %s422
      %v469 = vmul.f32 %v466, %v468
      %v470 = vmul.f32 %v467, %v468
      %471 = vst.msk [vmem:[#allocation2 + $0x91] sm:$0xff] %vm431, %v469
      %472 = vst.msk [vmem:[#allocation2 + $0x99] sm:$0xff] %vm431, %v470
      %v473 = vld [vmem:[%s5] sm:$0xff]
      %v474 = vld [vmem:[%s5 + $0x8] sm:$0xff]
      %v475 = vld [vmem:[%s5 + $0x10] sm:$0xff]
      %v476 = vld [vmem:[%s5 + $0x18] sm:$0xff]
      %v477 = vld [vmem:[%s5 + $0x20] sm:$0xff]
      %v478 = vld [vmem:[%s5 + $0x28] sm:$0xff]
      %v479 = vld [vmem:[%s5 + $0x30] sm:$0xff]
      %v480 = vld [vmem:[%s5 + $0x38] sm:$0xff]
      %v481 = vld [vmem:[%s5 + $0x40] sm:$0xff]
      %v482 = vld [vmem:[%s5 + $0x48] sm:$0xff]
      %v483 = vld [vmem:[%s5 + $0x50] sm:$0xff]
      %v484 = vld [vmem:[%s5 + $0x58] sm:$0xff]
      %v485 = vld [vmem:[%s5 + $0x60] sm:$0xff]
      %v486 = vld [vmem:[%s5 + $0x68] sm:$0xff]
      %v487 = vld [vmem:[%s5 + $0x70] sm:$0xff]
      %v488 = vld [vmem:[%s5 + $0x78] sm:$0xff]
      %v489 = vld [vmem:[%s4] sm:$0x1]
      %v491 = vlaneseq
      %v492 = vshrl.u32 %v491, 7
      %v493 = vsub.s32 0, %v492
      %v494 = vrot.slane %v489, %v493
      %v496 = vld [vmem:[#allocation2] sm:$0xff]
      %v497 = vld [vmem:[#allocation2 + $0x8] sm:$0xff]
      %v498 = vld [vmem:[#allocation2 + $0x10] sm:$0xff]
      %v499 = vld [vmem:[#allocation2 + $0x18] sm:$0xff]
      %v500 = vld [vmem:[#allocation2 + $0x20] sm:$0xff]
      %v501 = vld [vmem:[#allocation2 + $0x28] sm:$0xff]
      %v502 = vld [vmem:[#allocation2 + $0x30] sm:$0xff]
      %v503 = vld [vmem:[#allocation2 + $0x38] sm:$0xff]
      %v504 = vld [vmem:[#allocation2 + $0x40] sm:$0xff]
      %v505 = vld [vmem:[#allocation2 + $0x48] sm:$0xff]
      %v506 = vld [vmem:[#allocation2 + $0x50] sm:$0xff]
      %v507 = vld [vmem:[#allocation2 + $0x58] sm:$0xff]
      %v508 = vld [vmem:[#allocation2 + $0x60] sm:$0xff]
      %v509 = vld [vmem:[#allocation2 + $0x68] sm:$0xff]
      %v510 = vld [vmem:[#allocation2 + $0x70] sm:$0xff]
      %v511 = vld [vmem:[#allocation2 + $0x78] sm:$0xff]
      %v512 = vld [vmem:[%s3] sm:$0x1]
      %v513 = vlaneseq
      %v514 = vshrl.u32 %v513, 7
      %v515 = vsub.s32 0, %v514
      %v516 = vrot.slane %v512, %v515
      %v517 = vmul.f32 %v496, %v516
      %v518 = vmul.f32 %v497, %v516
      %v519 = vmul.f32 %v498, %v516
      %v520 = vmul.f32 %v499, %v516
      %v521 = vmul.f32 %v500, %v516
      %v522 = vmul.f32 %v501, %v516
      %v523 = vmul.f32 %v502, %v516
      %v524 = vmul.f32 %v503, %v516
      %v525 = vmul.f32 %v504, %v516
      %v526 = vmul.f32 %v505, %v516
      %v527 = vmul.f32 %v506, %v516
      %v528 = vmul.f32 %v507, %v516
      %v529 = vmul.f32 %v508, %v516
      %v530 = vmul.f32 %v509, %v516
      %v531 = vmul.f32 %v510, %v516
      %v532 = vmul.f32 %v511, %v516
      %v533 = vld [vmem:[#allocation2 + $0x80] sm:$0xff]
      %v534 = vld [vmem:[#allocation2 + $0x88] sm:$0xff]
      %v535 = vld [vmem:[%s3 + $0x3] sm:$0x1]
      %v536 = vlaneseq
      %v537 = vshrl.u32 %v536, 7
      %v538 = vsub.s32 0, %v537
      %v539 = vrot.slane %v535, %v538
      %v540 = vmul.f32 %v498, %v539
      %v541 = vmul.f32 %v499, %v539
      %v542 = vmul.f32 %v500, %v539
      %v543 = vmul.f32 %v501, %v539
      %v544 = vmul.f32 %v502, %v539
      %v545 = vmul.f32 %v503, %v539
      %v546 = vmul.f32 %v504, %v539
      %v547 = vmul.f32 %v505, %v539
      %v548 = vmul.f32 %v506, %v539
      %v549 = vmul.f32 %v507, %v539
      %v550 = vmul.f32 %v508, %v539
      %v551 = vmul.f32 %v509, %v539
      %v552 = vmul.f32 %v510, %v539
      %v553 = vmul.f32 %v511, %v539
      %v554 = vmul.f32 %v533, %v539
      %v555 = vmul.f32 %v534, %v539
      %v556 = vadd.f32 %v517, %v540
      %v557 = vadd.f32 %v518, %v541
      %v558 = vadd.f32 %v519, %v542
      %v559 = vadd.f32 %v520, %v543
      %v560 = vadd.f32 %v521, %v544
      %v561 = vadd.f32 %v522, %v545
      %v562 = vadd.f32 %v523, %v546
      %v563 = vadd.f32 %v524, %v547
      %v564 = vadd.f32 %v525, %v548
      %v565 = vadd.f32 %v526, %v549
      %v566 = vadd.f32 %v527, %v550
      %v567 = vadd.f32 %v528, %v551
      %v568 = vadd.f32 %v529, %v552
      %v569 = vadd.f32 %v530, %v553
      %v570 = vadd.f32 %v531, %v554
      %v571 = vadd.f32 %v532, %v555
      %v572 = vld [vmem:[#allocation2 + $0x90] sm:$0xff]
      %v573 = vld [vmem:[#allocation2 + $0x98] sm:$0xff]
      %v574 = vld [vmem:[%s3 + $0x6] sm:$0x1]
      %v575 = vlaneseq
      %v576 = vshrl.u32 %v575, 7
      %v577 = vsub.s32 0, %v576
      %v578 = vrot.slane %v574, %v577
      %v579 = vmul.f32 %v500, %v578
      %v580 = vmul.f32 %v501, %v578
      %v581 = vmul.f32 %v502, %v578
      %v582 = vmul.f32 %v503, %v578
      %v583 = vmul.f32 %v504, %v578
      %v584 = vmul.f32 %v505, %v578
      %v585 = vmul.f32 %v506, %v578
      %v586 = vmul.f32 %v507, %v578
      %v587 = vmul.f32 %v508, %v578
      %v588 = vmul.f32 %v509, %v578
      %v589 = vmul.f32 %v510, %v578
      %v590 = vmul.f32 %v511, %v578
      %v591 = vmul.f32 %v533, %v578
      %v592 = vmul.f32 %v534, %v578
      %v593 = vmul.f32 %v572, %v578
      %v594 = vmul.f32 %v573, %v578
      %v595 = vadd.f32 %v556, %v579
      %v596 = vadd.f32 %v557, %v580
      %v597 = vadd.f32 %v558, %v581
      %v598 = vadd.f32 %v559, %v582
      %v599 = vadd.f32 %v560, %v583
      %v600 = vadd.f32 %v561, %v584
      %v601 = vadd.f32 %v562, %v585
      %v602 = vadd.f32 %v563, %v586
      %v603 = vadd.f32 %v564, %v587
      %v604 = vadd.f32 %v565, %v588
      %v605 = vadd.f32 %v566, %v589
      %v606 = vadd.f32 %v567, %v590
      %v607 = vadd.f32 %v568, %v591
      %v608 = vadd.f32 %v569, %v592
      %v609 = vadd.f32 %v570, %v593
      %v610 = vadd.f32 %v571, %v594
      %v611 = vld [vmem:[#allocation2 + $0x1] sm:$0xff]
      %v612 = vld [vmem:[#allocation2 + $0x9] sm:$0xff]
      %v613 = vld [vmem:[#allocation2 + $0x11] sm:$0xff]
      %v614 = vld [vmem:[#allocation2 + $0x19] sm:$0xff]
      %v615 = vld [vmem:[#allocation2 + $0x21] sm:$0xff]
      %v616 = vld [vmem:[#allocation2 + $0x29] sm:$0xff]
      %v617 = vld [vmem:[#allocation2 + $0x31] sm:$0xff]
      %v618 = vld [vmem:[#allocation2 + $0x39] sm:$0xff]
      %v619 = vld [vmem:[#allocation2 + $0x41] sm:$0xff]
      %v620 = vld [vmem:[#allocation2 + $0x49] sm:$0xff]
      %v621 = vld [vmem:[#allocation2 + $0x51] sm:$0xff]
      %v622 = vld [vmem:[#allocation2 + $0x59] sm:$0xff]
      %v623 = vld [vmem:[#allocation2 + $0x61] sm:$0xff]
      %v624 = vld [vmem:[#allocation2 + $0x69] sm:$0xff]
      %v625 = vld [vmem:[#allocation2 + $0x71] sm:$0xff]
      %v626 = vld [vmem:[#allocation2 + $0x79] sm:$0xff]
      %v627 = vld [vmem:[%s3 + $0x1] sm:$0x1]
      %v628 = vlaneseq
      %v629 = vshrl.u32 %v628, 7
      %v630 = vsub.s32 0, %v629
      %v631 = vrot.slane %v627, %v630
      %v632 = vmul.f32 %v611, %v631
      %v633 = vmul.f32 %v612, %v631
      %v634 = vmul.f32 %v613, %v631
      %v635 = vmul.f32 %v614, %v631
      %v636 = vmul.f32 %v615, %v631
      %v637 = vmul.f32 %v616, %v631
      %v638 = vmul.f32 %v617, %v631
      %v639 = vmul.f32 %v618, %v631
      %v640 = vmul.f32 %v619, %v631
      %v641 = vmul.f32 %v620, %v631
      %v642 = vmul.f32 %v621, %v631
      %v643 = vmul.f32 %v622, %v631
      %v644 = vmul.f32 %v623, %v631
      %v645 = vmul.f32 %v624, %v631
      %v646 = vmul.f32 %v625, %v631
      %v647 = vmul.f32 %v626, %v631
      %v648 = vld [vmem:[#allocation2 + $0x81] sm:$0xff]
      %v649 = vld [vmem:[#allocation2 + $0x89] sm:$0xff]
      %v650 = vld [vmem:[%s3 + $0x4] sm:$0x1]
      %v651 = vlaneseq
      %v652 = vshrl.u32 %v651, 7
      %v653 = vsub.s32 0, %v652
      %v654 = vrot.slane %v650, %v653
      %v655 = vmul.f32 %v613, %v654
      %v656 = vmul.f32 %v614, %v654
      %v657 = vmul.f32 %v615, %v654
      %v658 = vmul.f32 %v616, %v654
      %v659 = vmul.f32 %v617, %v654
      %v660 = vmul.f32 %v618, %v654
      %v661 = vmul.f32 %v619, %v654
      %v662 = vmul.f32 %v620, %v654
      %v663 = vmul.f32 %v621, %v654
      %v664 = vmul.f32 %v622, %v654
      %v665 = vmul.f32 %v623, %v654
      %v666 = vmul.f32 %v624, %v654
      %v667 = vmul.f32 %v625, %v654
      %v668 = vmul.f32 %v626, %v654
      %v669 = vmul.f32 %v648, %v654
      %v670 = vmul.f32 %v649, %v654
      %v671 = vadd.f32 %v632, %v655
      %v672 = vadd.f32 %v633, %v656
      %v673 = vadd.f32 %v634, %v657
      %v674 = vadd.f32 %v635, %v658
      %v675 = vadd.f32 %v636, %v659
      %v676 = vadd.f32 %v637, %v660
      %v677 = vadd.f32 %v638, %v661
      %v678 = vadd.f32 %v639, %v662
      %v679 = vadd.f32 %v640, %v663
      %v680 = vadd.f32 %v641, %v664
      %v681 = vadd.f32 %v642, %v665
      %v682 = vadd.f32 %v643, %v666
      %v683 = vadd.f32 %v644, %v667
      %v684 = vadd.f32 %v645, %v668
      %v685 = vadd.f32 %v646, %v669
      %v686 = vadd.f32 %v647, %v670
      %v687 = vld [vmem:[#allocation2 + $0x91] sm:$0xff]
      %v688 = vld [vmem:[#allocation2 + $0x99] sm:$0xff]
      %v689 = vld [vmem:[%s3 + $0x7] sm:$0x1]
      %v690 = vlaneseq
      %v691 = vshrl.u32 %v690, 7
      %v692 = vsub.s32 0, %v691
      %v693 = vrot.slane %v689, %v692
      %v694 = vmul.f32 %v615, %v693
      %v695 = vmul.f32 %v616, %v693
      %v696 = vmul.f32 %v617, %v693
      %v697 = vmul.f32 %v618, %v693
      %v698 = vmul.f32 %v619, %v693
      %v699 = vmul.f32 %v620, %v693
      %v700 = vmul.f32 %v621, %v693
      %v701 = vmul.f32 %v622, %v693
      %v702 = vmul.f32 %v623, %v693
      %v703 = vmul.f32 %v624, %v693
      %v704 = vmul.f32 %v625, %v693
      %v705 = vmul.f32 %v626, %v693
      %v706 = vmul.f32 %v648, %v693
      %v707 = vmul.f32 %v649, %v693
      %v708 = vmul.f32 %v687, %v693
      %v709 = vmul.f32 %v688, %v693
      %v710 = vadd.f32 %v671, %v694
      %v711 = vadd.f32 %v672, %v695
      %v712 = vadd.f32 %v673, %v696
      %v713 = vadd.f32 %v674, %v697
      %v714 = vadd.f32 %v675, %v698
      %v715 = vadd.f32 %v676, %v699
      %v716 = vadd.f32 %v677, %v700
      %v717 = vadd.f32 %v678, %v701
      %v718 = vadd.f32 %v679, %v702
      %v719 = vadd.f32 %v680, %v703
      %v720 = vadd.f32 %v681, %v704
      %v721 = vadd.f32 %v682, %v705
      %v722 = vadd.f32 %v683, %v706
      %v723 = vadd.f32 %v684, %v707
      %v724 = vadd.f32 %v685, %v708
      %v725 = vadd.f32 %v686, %v709
      %v726 = vld [vmem:[#allocation2 + $0x2] sm:$0xff]
      %v727 = vld [vmem:[#allocation2 + $0xa] sm:$0xff]
      %v728 = vld [vmem:[#allocation2 + $0x12] sm:$0xff]
      %v729 = vld [vmem:[#allocation2 + $0x1a] sm:$0xff]
      %v730 = vld [vmem:[#allocation2 + $0x22] sm:$0xff]
      %v731 = vld [vmem:[#allocation2 + $0x2a] sm:$0xff]
      %v732 = vld [vmem:[#allocation2 + $0x32] sm:$0xff]
      %v733 = vld [vmem:[#allocation2 + $0x3a] sm:$0xff]
      %v734 = vld [vmem:[#allocation2 + $0x42] sm:$0xff]
      %v735 = vld [vmem:[#allocation2 + $0x4a] sm:$0xff]
      %v736 = vld [vmem:[#allocation2 + $0x52] sm:$0xff]
      %v737 = vld [vmem:[#allocation2 + $0x5a] sm:$0xff]
      %v738 = vld [vmem:[#allocation2 + $0x62] sm:$0xff]
      %v739 = vld [vmem:[#allocation2 + $0x6a] sm:$0xff]
      %v740 = vld [vmem:[#allocation2 + $0x72] sm:$0xff]
      %v741 = vld [vmem:[#allocation2 + $0x7a] sm:$0xff]
      %v742 = vld [vmem:[%s3 + $0x2] sm:$0x1]
      %v743 = vlaneseq
      %v744 = vshrl.u32 %v743, 7
      %v745 = vsub.s32 0, %v744
      %v746 = vrot.slane %v742, %v745
      %v747 = vmul.f32 %v726, %v746
      %v748 = vmul.f32 %v727, %v746
      %v749 = vmul.f32 %v728, %v746
      %v750 = vmul.f32 %v729, %v746
      %v751 = vmul.f32 %v730, %v746
      %v752 = vmul.f32 %v731, %v746
      %v753 = vmul.f32 %v732, %v746
      %v754 = vmul.f32 %v733, %v746
      %v755 = vmul.f32 %v734, %v746
      %v756 = vmul.f32 %v735, %v746
      %v757 = vmul.f32 %v736, %v746
      %v758 = vmul.f32 %v737, %v746
      %v759 = vmul.f32 %v738, %v746
      %v760 = vmul.f32 %v739, %v746
      %v761 = vmul.f32 %v740, %v746
      %v762 = vmul.f32 %v741, %v746
      %v763 = vld [vmem:[#allocation2 + $0x82] sm:$0xff]
      %v764 = vld [vmem:[#allocation2 + $0x8a] sm:$0xff]
      %v765 = vld [vmem:[%s3 + $0x5] sm:$0x1]
      %v766 = vlaneseq
      %v767 = vshrl.u32 %v766, 7
      %v768 = vsub.s32 0, %v767
      %v769 = vrot.slane %v765, %v768
      %v770 = vmul.f32 %v728, %v769
      %v771 = vmul.f32 %v729, %v769
      %v772 = vmul.f32 %v730, %v769
      %v773 = vmul.f32 %v731, %v769
      %v774 = vmul.f32 %v732, %v769
      %v775 = vmul.f32 %v733, %v769
      %v776 = vmul.f32 %v734, %v769
      %v777 = vmul.f32 %v735, %v769
      %v778 = vmul.f32 %v736, %v769
      %v779 = vmul.f32 %v737, %v769
      %v780 = vmul.f32 %v738, %v769
      %v781 = vmul.f32 %v739, %v769
      %v782 = vmul.f32 %v740, %v769
      %v783 = vmul.f32 %v741, %v769
      %v784 = vmul.f32 %v763, %v769
      %v785 = vmul.f32 %v764, %v769
      %v786 = vadd.f32 %v747, %v770
      %v787 = vadd.f32 %v748, %v771
      %v788 = vadd.f32 %v749, %v772
      %v789 = vadd.f32 %v750, %v773
      %v790 = vadd.f32 %v751, %v774
      %v791 = vadd.f32 %v752, %v775
      %v792 = vadd.f32 %v753, %v776
      %v793 = vadd.f32 %v754, %v777
      %v794 = vadd.f32 %v755, %v778
      %v795 = vadd.f32 %v756, %v779
      %v796 = vadd.f32 %v757, %v780
      %v797 = vadd.f32 %v758, %v781
      %v798 = vadd.f32 %v759, %v782
      %v799 = vadd.f32 %v760, %v783
      %v800 = vadd.f32 %v761, %v784
      %v801 = vadd.f32 %v762, %v785
      %v802 = vld [vmem:[#allocation2 + $0x92] sm:$0xff]
      %v803 = vld [vmem:[#allocation2 + $0x9a] sm:$0xff]
      %v804 = vld [vmem:[%s3 + $0x8] sm:$0x1]
      %v805 = vlaneseq
      %v806 = vshrl.u32 %v805, 7
      %v807 = vsub.s32 0, %v806
      %v808 = vrot.slane %v804, %v807
      %v809 = vmul.f32 %v730, %v808
      %v810 = vmul.f32 %v731, %v808
      %v811 = vmul.f32 %v732, %v808
      %v812 = vmul.f32 %v733, %v808
      %v813 = vmul.f32 %v734, %v808
      %v814 = vmul.f32 %v735, %v808
      %v815 = vmul.f32 %v736, %v808
      %v816 = vmul.f32 %v737, %v808
      %v817 = vmul.f32 %v738, %v808
      %v818 = vmul.f32 %v739, %v808
      %v819 = vmul.f32 %v740, %v808
      %v820 = vmul.f32 %v741, %v808
      %v821 = vmul.f32 %v763, %v808
      %v822 = vmul.f32 %v764, %v808
      %v823 = vmul.f32 %v802, %v808
      %v824 = vmul.f32 %v803, %v808
      %v825 = vadd.f32 %v786, %v809
      %v826 = vadd.f32 %v787, %v810
      %v827 = vadd.f32 %v788, %v811
      %v828 = vadd.f32 %v789, %v812
      %v829 = vadd.f32 %v790, %v813
      %v830 = vadd.f32 %v791, %v814
      %v831 = vadd.f32 %v792, %v815
      %v832 = vadd.f32 %v793, %v816
      %v833 = vadd.f32 %v794, %v817
      %v834 = vadd.f32 %v795, %v818
      %v835 = vadd.f32 %v796, %v819
      %v836 = vadd.f32 %v797, %v820
      %v837 = vadd.f32 %v798, %v821
      %v838 = vadd.f32 %v799, %v822
      %v839 = vadd.f32 %v800, %v823
      %v840 = vadd.f32 %v801, %v824
      %842 = vset.pattern.permute.xlu0 0
      %843 = vperm.xlu0 %842, %v473
      %v844 = vpop.permute.xlu0 %843
      %847 = vset.pattern.permute.xlu0 0
      %848 = vperm.xlu0 %847, %v474
      %v849 = vpop.permute.xlu0 %848
      %852 = vset.pattern.permute.xlu0 0
      %853 = vperm.xlu0 %852, %v475
      %v854 = vpop.permute.xlu0 %853
      %857 = vset.pattern.permute.xlu0 0
      %858 = vperm.xlu0 %857, %v476
      %v859 = vpop.permute.xlu0 %858
      %862 = vset.pattern.permute.xlu0 0
      %863 = vperm.xlu0 %862, %v477
      %v864 = vpop.permute.xlu0 %863
      %867 = vset.pattern.permute.xlu0 0
      %868 = vperm.xlu0 %867, %v478
      %v869 = vpop.permute.xlu0 %868
      %872 = vset.pattern.permute.xlu0 0
      %873 = vperm.xlu0 %872, %v479
      %v874 = vpop.permute.xlu0 %873
      %877 = vset.pattern.permute.xlu0 0
      %878 = vperm.xlu0 %877, %v480
      %v879 = vpop.permute.xlu0 %878
      %882 = vset.pattern.permute.xlu0 0
      %883 = vperm.xlu0 %882, %v481
      %v884 = vpop.permute.xlu0 %883
      %887 = vset.pattern.permute.xlu0 0
      %888 = vperm.xlu0 %887, %v482
      %v889 = vpop.permute.xlu0 %888
      %892 = vset.pattern.permute.xlu0 0
      %893 = vperm.xlu0 %892, %v483
      %v894 = vpop.permute.xlu0 %893
      %897 = vset.pattern.permute.xlu0 0
      %898 = vperm.xlu0 %897, %v484
      %v899 = vpop.permute.xlu0 %898
      %902 = vset.pattern.permute.xlu0 0
      %903 = vperm.xlu0 %902, %v485
      %v904 = vpop.permute.xlu0 %903
      %907 = vset.pattern.permute.xlu0 0
      %908 = vperm.xlu0 %907, %v486
      %v909 = vpop.permute.xlu0 %908
      %912 = vset.pattern.permute.xlu0 0
      %913 = vperm.xlu0 %912, %v487
      %v914 = vpop.permute.xlu0 %913
      %917 = vset.pattern.permute.xlu0 0
      %918 = vperm.xlu0 %917, %v488
      %v919 = vpop.permute.xlu0 %918
      %v921 = vmul.f32 %v595, %v844
      %v922 = vmul.f32 %v596, %v849
      %v923 = vmul.f32 %v597, %v854
      %v924 = vmul.f32 %v598, %v859
      %v925 = vmul.f32 %v599, %v864
      %v926 = vmul.f32 %v600, %v869
      %v927 = vmul.f32 %v601, %v874
      %v928 = vmul.f32 %v602, %v879
      %v929 = vmul.f32 %v603, %v884
      %v930 = vmul.f32 %v604, %v889
      %v931 = vmul.f32 %v605, %v894
      %v932 = vmul.f32 %v606, %v899
      %v933 = vmul.f32 %v607, %v904
      %v934 = vmul.f32 %v608, %v909
      %v935 = vmul.f32 %v609, %v914
      %v936 = vmul.f32 %v610, %v919
      %v937 = vadd.f32 %v494, %v921
      %v938 = vadd.f32 %v494, %v922
      %v939 = vadd.f32 %v494, %v923
      %v940 = vadd.f32 %v494, %v924
      %v941 = vadd.f32 %v494, %v925
      %v942 = vadd.f32 %v494, %v926
      %v943 = vadd.f32 %v494, %v927
      %v944 = vadd.f32 %v494, %v928
      %v945 = vadd.f32 %v494, %v929
      %v946 = vadd.f32 %v494, %v930
      %v947 = vadd.f32 %v494, %v931
      %v948 = vadd.f32 %v494, %v932
      %v949 = vadd.f32 %v494, %v933
      %v950 = vadd.f32 %v494, %v934
      %v951 = vadd.f32 %v494, %v935
      %v952 = vadd.f32 %v494, %v936
      %v953 = vadd.f32 %v937, %v710
      %v954 = vadd.f32 %v938, %v711
      %v955 = vadd.f32 %v939, %v712
      %v956 = vadd.f32 %v940, %v713
      %v957 = vadd.f32 %v941, %v714
      %v958 = vadd.f32 %v942, %v715
      %v959 = vadd.f32 %v943, %v716
      %v960 = vadd.f32 %v944, %v717
      %v961 = vadd.f32 %v945, %v718
      %v962 = vadd.f32 %v946, %v719
      %v963 = vadd.f32 %v947, %v720
      %v964 = vadd.f32 %v948, %v721
      %v965 = vadd.f32 %v949, %v722
      %v966 = vadd.f32 %v950, %v723
      %v967 = vadd.f32 %v951, %v724
      %v968 = vadd.f32 %v952, %v725
      %969 = vset.pattern.permute.xlu0 1
      %970 = vperm.xlu0 %969, %v473
      %v971 = vpop.permute.xlu0 %970
      %973 = vset.pattern.permute.xlu0 1
      %974 = vperm.xlu0 %973, %v474
      %v975 = vpop.permute.xlu0 %974
      %977 = vset.pattern.permute.xlu0 1
      %978 = vperm.xlu0 %977, %v475
      %v979 = vpop.permute.xlu0 %978
      %981 = vset.pattern.permute.xlu0 1
      %982 = vperm.xlu0 %981, %v476
      %v983 = vpop.permute.xlu0 %982
      %985 = vset.pattern.permute.xlu0 1
      %986 = vperm.xlu0 %985, %v477
      %v987 = vpop.permute.xlu0 %986
      %989 = vset.pattern.permute.xlu0 1
      %990 = vperm.xlu0 %989, %v478
      %v991 = vpop.permute.xlu0 %990
      %993 = vset.pattern.permute.xlu0 1
      %994 = vperm.xlu0 %993, %v479
      %v995 = vpop.permute.xlu0 %994
      %997 = vset.pattern.permute.xlu0 1
      %998 = vperm.xlu0 %997, %v480
      %v999 = vpop.permute.xlu0 %998
      %1001 = vset.pattern.permute.xlu0 1
      %1002 = vperm.xlu0 %1001, %v481
      %v1003 = vpop.permute.xlu0 %1002
      %1005 = vset.pattern.permute.xlu0 1
      %1006 = vperm.xlu0 %1005, %v482
      %v1007 = vpop.permute.xlu0 %1006
      %1009 = vset.pattern.permute.xlu0 1
      %1010 = vperm.xlu0 %1009, %v483
      %v1011 = vpop.permute.xlu0 %1010
      %1013 = vset.pattern.permute.xlu0 1
      %1014 = vperm.xlu0 %1013, %v484
      %v1015 = vpop.permute.xlu0 %1014
      %1017 = vset.pattern.permute.xlu0 1
      %1018 = vperm.xlu0 %1017, %v485
      %v1019 = vpop.permute.xlu0 %1018
      %1021 = vset.pattern.permute.xlu0 1
      %1022 = vperm.xlu0 %1021, %v486
      %v1023 = vpop.permute.xlu0 %1022
      %1025 = vset.pattern.permute.xlu0 1
      %1026 = vperm.xlu0 %1025, %v487
      %v1027 = vpop.permute.xlu0 %1026
      %1029 = vset.pattern.permute.xlu0 1
      %1030 = vperm.xlu0 %1029, %v488
      %v1031 = vpop.permute.xlu0 %1030
      %v1033 = vmul.f32 %v825, %v971
      %v1034 = vmul.f32 %v826, %v975
      %v1035 = vmul.f32 %v827, %v979
      %v1036 = vmul.f32 %v828, %v983
      %v1037 = vmul.f32 %v829, %v987
      %v1038 = vmul.f32 %v830, %v991
      %v1039 = vmul.f32 %v831, %v995
      %v1040 = vmul.f32 %v832, %v999
      %v1041 = vmul.f32 %v833, %v1003
      %v1042 = vmul.f32 %v834, %v1007
      %v1043 = vmul.f32 %v835, %v1011
      %v1044 = vmul.f32 %v836, %v1015
      %v1045 = vmul.f32 %v837, %v1019
      %v1046 = vmul.f32 %v838, %v1023
      %v1047 = vmul.f32 %v839, %v1027
      %v1048 = vmul.f32 %v840, %v1031
      %v1049 = vadd.f32 %v953, %v1033
      %v1050 = vadd.f32 %v954, %v1034
      %v1051 = vadd.f32 %v955, %v1035
      %v1052 = vadd.f32 %v956, %v1036
      %v1053 = vadd.f32 %v957, %v1037
      %v1054 = vadd.f32 %v958, %v1038
      %v1055 = vadd.f32 %v959, %v1039
      %v1056 = vadd.f32 %v960, %v1040
      %v1057 = vadd.f32 %v961, %v1041
      %v1058 = vadd.f32 %v962, %v1042
      %v1059 = vadd.f32 %v963, %v1043
      %v1060 = vadd.f32 %v964, %v1044
      %v1061 = vadd.f32 %v965, %v1045
      %v1062 = vadd.f32 %v966, %v1046
      %v1063 = vadd.f32 %v967, %v1047
      %v1064 = vadd.f32 %v968, %v1048
      %1065 = vst.msk [vmem:[%s417] sm:$0xff] %vm431, %v1049
      %1066 = vst.msk [vmem:[%s417 + $0x8] sm:$0xff] %vm431, %v1050
      %1067 = vst.msk [vmem:[%s417 + $0x10] sm:$0xff] %vm431, %v1051
      %1068 = vst.msk [vmem:[%s417 + $0x18] sm:$0xff] %vm431, %v1052
      %1069 = vst.msk [vmem:[%s417 + $0x20] sm:$0xff] %vm431, %v1053
      %1070 = vst.msk [vmem:[%s417 + $0x28] sm:$0xff] %vm431, %v1054
      %1071 = vst.msk [vmem:[%s417 + $0x30] sm:$0xff] %vm431, %v1055
      %1072 = vst.msk [vmem:[%s417 + $0x38] sm:$0xff] %vm431, %v1056
      %1073 = vst.msk [vmem:[%s417 + $0x40] sm:$0xff] %vm431, %v1057
      %1074 = vst.msk [vmem:[%s417 + $0x48] sm:$0xff] %vm431, %v1058
      %1075 = vst.msk [vmem:[%s417 + $0x50] sm:$0xff] %vm431, %v1059
      %1076 = vst.msk [vmem:[%s417 + $0x58] sm:$0xff] %vm431, %v1060
      %1077 = vst.msk [vmem:[%s417 + $0x60] sm:$0xff] %vm431, %v1061
      %1078 = vst.msk [vmem:[%s417 + $0x68] sm:$0xff] %vm431, %v1062
      %1079 = vst.msk [vmem:[%s417 + $0x70] sm:$0xff] %vm431, %v1063
      %1080 = vst.msk [vmem:[%s417 + $0x78] sm:$0xff] %vm431, %v1064
      %s1081 = smul.u32 16, %s22
      %p1082 = scmp.lt.s32.totalorder %s21, 1
      %s1083 = scalar_select %p1082, %s21, 1
      %p1084 = scmp.lt.s32.totalorder %s1081, 31
      %s1085 = scalar_select %p1084, %s1081, 31
      %s1086 = smul.addr %s1083, 32
      %s1087 = sadd.s32 %s1085, %s1086
      %s1088 = smul.addr %s1087, 8
      %s1089 = scalar_lea.vmem %s6, %s1088
      // Predicated region
      $region45: #{tpu_custom_call.1} parent=43 // pred_check
        %p1090 = pneg %p212
      $region46: #{tpu_custom_call.1} parent=43 // pred_check_branch
        %1092 = sbr.rel (%p1090) target = $region48
      $region47: #{tpu_custom_call.1} parent=43 // pred_region
        %s1093 = smul.u32 16, %s22
      $region48: #{tpu_custom_call.1} parent=43 // pred_fallthru
        _
    $region44: #{tpu_custom_call.1} parent=5 // pred_fallthru
      _
    %p1094 = scmp.le.s32.totalorder 2, %s12
    // Predicated region
    $region49: #{tpu_custom_call.1} parent=5 // pred_check
      %p1095 = pneg %p1094
    $region50: #{tpu_custom_call.1} parent=5 // pred_check_branch
      %1097 = sbr.rel (%p1095) target = $region52
    $region51: #{tpu_custom_call.1} parent=5 // pred_region
      %s1098 = ssub.s32 %s12, 2
      // Predicated region
      $region53: #{tpu_custom_call.1} parent=51 // pred_check
        %p1099 = pneg %p218
      $region54: #{tpu_custom_call.1} parent=51 // pred_check_branch
        %1101 = sbr.rel (%p1099) target = $region56
      $region55: #{tpu_custom_call.1} parent=51 // pred_region
        %s1102 = smul.u32 16, %s24
        %p1103 = scmp.lt.s32.totalorder %s23, 1
        %s1104 = scalar_select %p1103, %s23, 1
        %p1105 = scmp.lt.s32.totalorder %s1102, 31
        %s1106 = scalar_select %p1105, %s1102, 31
        %s1107 = smul.addr %s1104, 32
        %s1108 = sadd.s32 %s1106, %s1107
        %s1109 = smul.addr %s1108, 8
        %s1110 = scalar_lea.vmem %s6, %s1109
      $region56: #{tpu_custom_call.1} parent=51 // pred_fallthru
        _
    $region52: #{tpu_custom_call.1} parent=5 // pred_fallthru
      _
  $region6: #{tpu_custom_call.1} parent=0 // loop_footer
    %s16 = sadd.s32 1, %s12
  $region7: #{tpu_custom_call.1} parent=0 // loop_footer_branch
    %11 = sbr.rel target = $region3
  $region8: #{tpu_custom_call.1} parent=0 // loop_exit
    _

</llo_original>
